<compile_context>
chip_gen: v6e
topology: v6e:2x2x1
jax: 0.10.0
libtpu: 0.0.40
codegen_flags: <defaults>
</compile_context>

<pallas_src>
import functools

import jax
import jax.numpy as jnp
from jax import lax
from jax.experimental import pallas as pl
from jax.experimental.pallas import tpu as pltpu

_LANES = 128
_CHUNK_ROWS = 512     # in-kernel accumulation strip: 512*128*4 B = 256 KiB f32 temp


def _chip_config():
    """Per-generation tiling/pipelining knobs (conservative default)."""
    try:
        kind = jax.devices()[0].device_kind.lower()
    except Exception:
        kind = ""
    if "v7" in kind:
        # 2 TensorCores, 3.2 TB/s HBM, 64 MiB VMEM -> big blocks, deeper pipe.
        return dict(ncores=2, budget_bytes=6 << 20, vmem_limit_bytes=48 << 20, nbuf=3)
    if "v6" in kind:
        return dict(ncores=1, budget_bytes=4 << 20, vmem_limit_bytes=None, nbuf=2)
    # v5e / v5p / v4 / unknown: default scoped VMEM can be 16 MiB -> 2 MiB blocks.
    return dict(ncores=1, budget_bytes=2 << 20, vmem_limit_bytes=None, nbuf=2)


def _vae_loss_kernel(ncores, rows, tile_rows, tiles_per_core, num_row_blocks,
                     chunk_rows, acc_rows, inv_n_xy, inv_n_latent, ragged,
                     x_ref, y_ref, mean_ref, logvar_ref, out_ref, acc_ref):
    if ncores > 1:
        c = pl.program_id(0)            # CORE_PARALLEL axis (v7x)
        j = pl.program_id(1)            # streaming / reduction axis
        nj = pl.num_programs(1)
        tile = c * tiles_per_core + j
    else:
        c = None
        j = pl.program_id(0)
        nj = pl.num_programs(0)
        tile = j

    @pl.when(j == 0)
    def _init():
        acc_ref[...] = jnp.zeros_like(acc_ref)

    # ---- streaming MSE partial: load / sub / mul / add on the VPU only ----
    def _partial_sq(xs, ys, rid_base, masked):
        d = xs.astype(jnp.float32) - ys.astype(jnp.float32)
        if masked:
            rid = rid_base + lax.broadcasted_iota(jnp.int32, (d.shape[0], 1), 0)
            d = jnp.where(rid < rows, d, 0.0)
        sq = d * d
        if sq.shape[0] == acc_rows:
            return sq
        # Elementwise (VALU-only) fold of sublane groups into (acc_rows, 128).
        return sq.reshape(-1, acc_rows, sq.shape[1]).sum(axis=0)

    def _accumulate(masked):
        def _run():
            nchunks = tile_rows // chunk_rows            # static
            base = tile * tile_rows
            if nchunks == 1:
                acc_ref[...] += _partial_sq(x_ref[...], y_ref[...], base, masked)
            else:
                # Chunked accumulation keeps f32 temporaries at ~256 KiB and the
                # carried accumulator at a single (8, 128) vreg.
                def body(ci, acc):
                    r0 = pl.multiple_of(ci * chunk_rows, chunk_rows)
                    xs = x_ref[pl.ds(r0, chunk_rows), :]
                    ys = y_ref[pl.ds(r0, chunk_rows), :]
                    return acc + _partial_sq(xs, ys, base + r0, masked)
                acc = lax.fori_loop(0, nchunks, body,
                                    jnp.zeros(acc_ref.shape, jnp.float32))
                acc_ref[...] += acc
        return _run

    last = num_row_blocks - 1
    oob_possible = (ncores > 1) and (ncores * tiles_per_core > num_row_blocks)
    if ragged or oob_possible:
        # Only the ragged last tile pays for the iota/compare/select; clamped
        # out-of-range tiles (tile > last, v7x odd-split only) skip entirely.
        pl.when(tile < last)(_accumulate(False))
        pl.when(tile == last)(_accumulate(ragged))
    else:
        _accumulate(False)()

    @pl.when(j == nj - 1)
    def _finalize():
        mse_part = jnp.sum(acc_ref[...]) * inv_n_xy       # single cross-lane reduce
        out_ref[...] = jnp.broadcast_to(mse_part, out_ref.shape).astype(out_ref.dtype)

        def _add_kl():
            lv = logvar_ref[...].astype(jnp.float32)
            mu = mean_ref[...].astype(jnp.float32)
            kl = jnp.sum(-0.5 * (lv - jnp.exp(lv) - mu * mu + 1.0)) * inv_n_latent
            out_ref[...] = out_ref[...] + kl

        if ncores > 1:
            pl.when(c == 0)(_add_kl)      # exp on the EUP exactly once
        else:
            _add_kl()


def _resident_2d(a):
    """Copy-free 2D view for the tiny, VMEM-resident latent stats."""
    if a.size % _LANES == 0:
        return a.reshape(a.size // _LANES, _LANES)
    return a.reshape(-1, a.shape[-1])


def vae_loss(x, y, mean, logvar):
    cfg = _chip_config()

    n = x.size
    inv_n_xy = 1.0 / float(n)
    inv_n_latent = 1.0 / float(mean.size)

    m2d = _resident_2d(mean)
    lv2d = _resident_2d(logvar)

    rows = n // _LANES
    tail = None
    if n % _LANES != 0:
        # Lane-dense main slab + tiny (<128 elem) wrapper-side tail sum.
        xf = x.reshape(-1)
        yf = y.reshape(-1)
        main = rows * _LANES
        tail = jnp.sum((xf[main:].astype(jnp.float32)
                        - yf[main:].astype(jnp.float32)) ** 2)
        if rows == 0:
            # Degenerate (< 128 elements): nothing worth streaming through a kernel.
            lv = logvar.astype(jnp.float32)
            mu = mean.astype(jnp.float32)
            kl = jnp.mean(-0.5 * (lv - jnp.exp(lv) - mu * mu + 1.0))
            return tail * inv_n_xy + kl
        x2d = xf[:main].reshape(rows, _LANES)
        y2d = yf[:main].reshape(rows, _LANES)
    else:
        x2d = x.reshape(rows, _LANES)
        y2d = y.reshape(rows, _LANES)

    # ---- tile sizing by VMEM byte budget (per input, per pipeline buffer) ----
    itemsize = max(x.dtype.itemsize, y.dtype.itemsize)
    rows_budget = max(8, cfg["budget_bytes"] // (_LANES * itemsize))
    if rows <= rows_budget:
        tile_rows = rows                                   # single full tile
    else:
        tile_rows = (rows_budget // _CHUNK_ROWS) * _CHUNK_ROWS
        if tile_rows == 0:                                 # pathological tiny budget
            mult = max(8, 32 // itemsize)
            tile_rows = max(mult, (rows_budget // mult) * mult)
    num_row_blocks = pl.cdiv(rows, tile_rows)

    ncores = cfg["ncores"] if num_row_blocks > 1 else 1
    tiles_per_core = pl.cdiv(num_row_blocks, ncores)

    if tile_rows > _CHUNK_ROWS and tile_rows % _CHUNK_ROWS == 0:
        chunk_rows = _CHUNK_ROWS
    else:
        chunk_rows = tile_rows
    acc_rows = 8 if tile_rows % 8 == 0 else tile_rows      # (8,128) acc in the fast path
    ragged = (rows % tile_rows) != 0

    kernel = functools.partial(
        _vae_loss_kernel, ncores, rows, tile_rows, tiles_per_core,
        num_row_blocks, chunk_rows, acc_rows, inv_n_xy, inv_n_latent, ragged)

    if ncores > 1:
        grid = (ncores, tiles_per_core)

        def xy_map(c, j):
            # Clamp so the DMA stays in-bounds; out-of-range tiles skip accumulation.
            return (jnp.minimum(c * tiles_per_core + j, num_row_blocks - 1), 0)

        latent_map = lambda c, j: (0, 0)
        out_map = lambda c, j: (c, 0, 0)
        dim_sem = (pltpu.CORE_PARALLEL, pltpu.ARBITRARY)
    else:
        grid = (num_row_blocks,)
        xy_map = lambda j: (j, 0)
        latent_map = lambda j: (0, 0)
        out_map = lambda j: (0, 0, 0)
        dim_sem = ("arbitrary",)

    def xy_spec():
        if cfg["nbuf"] > 2:
            try:
                return pl.BlockSpec((tile_rows, _LANES), xy_map,
                                    pipeline_mode=pl.Buffered(cfg["nbuf"]))
            except TypeError:
                pass
        return pl.BlockSpec((tile_rows, _LANES), xy_map)

    cp_kwargs = dict(dimension_semantics=dim_sem)
    if cfg["vmem_limit_bytes"] is not None:
        cp_kwargs["vmem_limit_bytes"] = cfg["vmem_limit_bytes"]

    cost = pl.CostEstimate(
        flops=3 * rows * _LANES + 6 * int(mean.size),
        transcendentals=int(mean.size),
        bytes_accessed=(rows * _LANES * (x.dtype.itemsize + y.dtype.itemsize)
                        + mean.size * mean.dtype.itemsize
                        + logvar.size * logvar.dtype.itemsize
                        + ncores * 8 * _LANES * 4))

    partials = pl.pallas_call(
        kernel,
        out_shape=jax.ShapeDtypeStruct((ncores, 8, _LANES), jnp.float32),
        grid_spec=pltpu.PrefetchScalarGridSpec(
            num_scalar_prefetch=0,
            grid=grid,
            in_specs=[
                xy_spec(),
                xy_spec(),
                pl.BlockSpec(m2d.shape, latent_map),    # VMEM-resident latents
                pl.BlockSpec(lv2d.shape, latent_map),
            ],
            out_specs=pl.BlockSpec((1, 8, _LANES), out_map),
            scratch_shapes=[pltpu.VMEM((acc_rows, _LANES), jnp.float32)],
        ),
        compiler_params=pltpu.CompilerParams(**cp_kwargs),
        cost_estimate=cost,
    )(x2d, y2d, m2d, lv2d)

    loss = jnp.sum(partials[:, 0, 0])
    if tail is not None:
        loss = loss + tail * inv_n_xy
    return loss


def vae_loss_ref(x, y, mean, logvar):
    kl = jnp.mean(-0.5 * (logvar - jnp.exp(logvar) - mean ** 2 + 1.0))
    mse = jnp.mean((x - y) ** 2)
    return mse + kl


if __name__ == "__main__":
    key = jax.random.PRNGKey(0)
    kx, ky, km, kl_ = jax.random.split(key, 4)

    # x, y: reconstruction / target images (NCHW); mean, logvar: latent stats.
    x = jax.random.normal(kx, (2, 4, 16, 16), jnp.float32)
    y = jax.random.normal(ky, (2, 4, 16, 16), jnp.float32)
    mean = jax.random.normal(km, (2, 32), jnp.float32)
    logvar = 0.1 * jax.random.normal(kl_, (2, 32), jnp.float32)

    loss = jax.block_until_ready(vae_loss(x, y, mean, logvar))
    ref = jax.block_until_ready(vae_loss_ref(x, y, mean, logvar))

    assert jnp.allclose(loss, ref, rtol=1e-5, atol=1e-5), (loss, ref)
    print("KERNEL_OK")
</pallas_src>

<mosaic_0001>
module attributes {stable_mosaic.version = 11 : i64} {
  func.func @_vae_loss_kernel(%arg0: i32, %arg1: memref<16x128xf32, #tpu.memory_space<vmem>>, %arg2: memref<16x128xf32, #tpu.memory_space<vmem>>, %arg3: memref<2x32xf32, #tpu.memory_space<vmem>>, %arg4: memref<2x32xf32, #tpu.memory_space<vmem>>, %arg5: memref<1x8x128xf32, #tpu.memory_space<vmem>>, %arg6: memref<8x128xf32, #tpu.memory_space<vmem>>) attributes {dimension_semantics = [#tpu.dimension_semantics<arbitrary>], iteration_bounds = array<i64: 1>, scalar_prefetch = 0 : i64, scratch_operands = 1 : i64, tpu.core_type = #tpu.core_type<tc>, window_params = [{transform_indices = @transform_0, window_bounds = array<i64: 16, 128>}, {transform_indices = @transform_1, window_bounds = array<i64: 16, 128>}, {pipeline_mode = #tpu.pipeline_mode<synchronous>, transform_indices = @transform_2, window_bounds = array<i64: 2, 32>}, {pipeline_mode = #tpu.pipeline_mode<synchronous>, transform_indices = @transform_3, window_bounds = array<i64: 2, 32>}, {pipeline_mode = #tpu.pipeline_mode<synchronous>, transform_indices = @transform_4, window_bounds = array<i64: 1, 8, 128>}]} {
    %c0_i32 = arith.constant 0 : i32
    %0 = arith.cmpi eq, %arg0, %c0_i32 : i32
    %1 = arith.extui %0 : i1 to i32
    %c0_i32_0 = arith.constant 0 : i32
    %2 = arith.cmpi ne, %1, %c0_i32_0 : i32
    scf.if %2 {
      %cst_10 = arith.constant 0.000000e+00 : f32
      %15 = vector.broadcast %cst_10 : f32 to vector<8x128xf32>
      %c0_11 = arith.constant 0 : index
      %c0_12 = arith.constant 0 : index
      %16 = vector.load %arg6[%c0_11, %c0_12] : memref<8x128xf32, #tpu.memory_space<vmem>>, vector<8x128xf32>
      tpu.vector_store %arg6[%c0_11, %c0_12], %15 {strides = array<i32>} : memref<8x128xf32, #tpu.memory_space<vmem>>, vector<8x128xf32>,
    } else {
    }
    %c0 = arith.constant 0 : index
    %c0_1 = arith.constant 0 : index
    %3 = vector.load %arg6[%c0, %c0_1] : memref<8x128xf32, #tpu.memory_space<vmem>>, vector<8x128xf32>
    %c0_2 = arith.constant 0 : index
    %c0_3 = arith.constant 0 : index
    %4 = vector.load %arg1[%c0_2, %c0_3] : memref<16x128xf32, #tpu.memory_space<vmem>>, vector<16x128xf32>
    %c0_4 = arith.constant 0 : index
    %c0_5 = arith.constant 0 : index
    %5 = vector.load %arg2[%c0_4, %c0_5] : memref<16x128xf32, #tpu.memory_space<vmem>>, vector<16x128xf32>
    %6 = arith.subf %4, %5 : vector<16x128xf32>
    %7 = arith.mulf %6, %6 : vector<16x128xf32>
    %8 = vector.shape_cast %7 : vector<16x128xf32> to vector<2x8x128xf32>
    %cst = arith.constant dense<0.000000e+00> : vector<8x128xf32>
    %9 = vector.multi_reduction <add>, %8, %cst [0] : vector<2x8x128xf32> to vector<8x128xf32>
    %10 = arith.addf %3, %9 : vector<8x128xf32>
    %c0_6 = arith.constant 0 : index
    %c0_7 = arith.constant 0 : index
    %11 = vector.load %arg6[%c0_6, %c0_7] : memref<8x128xf32, #tpu.memory_space<vmem>>, vector<8x128xf32>
    tpu.vector_store %arg6[%c0_6, %c0_7], %10 {strides = array<i32>} : memref<8x128xf32, #tpu.memory_space<vmem>>, vector<8x128xf32>,
    %c0_i32_8 = arith.constant 0 : i32
    %12 = arith.cmpi eq, %arg0, %c0_i32_8 : i32
    %13 = arith.extui %12 : i1 to i32
    %c0_i32_9 = arith.constant 0 : i32
    %14 = arith.cmpi ne, %13, %c0_i32_9 : i32
    scf.if %14 {
      %c0_10 = arith.constant 0 : index
      %c0_11 = arith.constant 0 : index
      %15 = vector.load %arg6[%c0_10, %c0_11] : memref<8x128xf32, #tpu.memory_space<vmem>>, vector<8x128xf32>
      %16 = vector.shape_cast %15 : vector<8x128xf32> to vector<1x8x128xf32>
      %cst_12 = arith.constant dense<0.000000e+00> : vector<1xf32>
      %17 = vector.multi_reduction <add>, %16, %cst_12 [1, 2] : vector<1x8x128xf32> to vector<1xf32>
      %18 = vector.shape_cast %17 : vector<1xf32> to vector<1x1x1xf32>
      %19 = vector.extract %18[0, 0, 0] : f32 from vector<1x1x1xf32>
      %cst_13 = arith.constant 4.8828125E-4 : f32
      %20 = arith.mulf %19, %cst_13 : f32
      %21 = vector.broadcast %20 : f32 to vector<1x8x128xf32>
      %c0_14 = arith.constant 0 : index
      %c0_15 = arith.constant 0 : index
      %c0_16 = arith.constant 0 : index
      %22 = vector.load %arg5[%c0_14, %c0_15, %c0_16] : memref<1x8x128xf32, #tpu.memory_space<vmem>>, vector<1x8x128xf32>
      tpu.vector_store %arg5[%c0_14, %c0_15, %c0_16], %21 {strides = array<i32>} : memref<1x8x128xf32, #tpu.memory_space<vmem>>, vector<1x8x128xf32>,
      %c0_17 = arith.constant 0 : index
      %c0_18 = arith.constant 0 : index
      %23 = vector.load %arg4[%c0_17, %c0_18] : memref<2x32xf32, #tpu.memory_space<vmem>>, vector<2x32xf32>
      %c0_19 = arith.constant 0 : index
      %c0_20 = arith.constant 0 : index
      %24 = vector.load %arg3[%c0_19, %c0_20] : memref<2x32xf32, #tpu.memory_space<vmem>>, vector<2x32xf32>
      %25 = math.exp %23 : vector<2x32xf32>
      %26 = arith.subf %23, %25 : vector<2x32xf32>
      %27 = arith.mulf %24, %24 : vector<2x32xf32>
      %28 = arith.subf %26, %27 : vector<2x32xf32>
      %cst_21 = arith.constant 1.000000e+00 : f32
      %29 = vector.broadcast %cst_21 : f32 to vector<2x32xf32>
      %30 = arith.addf %28, %29 : vector<2x32xf32>
      %cst_22 = arith.constant -5.000000e-01 : f32
      %31 = vector.broadcast %cst_22 : f32 to vector<2x32xf32>
      %32 = arith.mulf %31, %30 : vector<2x32xf32>
      %33 = vector.shape_cast %32 : vector<2x32xf32> to vector<1x2x32xf32>
      %cst_23 = arith.constant dense<0.000000e+00> : vector<1xf32>
      %34 = vector.multi_reduction <add>, %33, %cst_23 [1, 2] : vector<1x2x32xf32> to vector<1xf32>
      %35 = vector.shape_cast %34 : vector<1xf32> to vector<1x1x1xf32>
      %36 = vector.extract %35[0, 0, 0] : f32 from vector<1x1x1xf32>
      %cst_24 = arith.constant 1.562500e-02 : f32
      %37 = arith.mulf %36, %cst_24 : f32
      %c0_25 = arith.constant 0 : index
      %c0_26 = arith.constant 0 : index
      %c0_27 = arith.constant 0 : index
      %38 = vector.load %arg5[%c0_25, %c0_26, %c0_27] : memref<1x8x128xf32, #tpu.memory_space<vmem>>, vector<1x8x128xf32>
      %39 = vector.broadcast %37 : f32 to vector<1x8x128xf32>
      %40 = arith.addf %38, %39 : vector<1x8x128xf32>
      %c0_28 = arith.constant 0 : index
      %c0_29 = arith.constant 0 : index
      %c0_30 = arith.constant 0 : index
      %41 = vector.load %arg5[%c0_28, %c0_29, %c0_30] : memref<1x8x128xf32, #tpu.memory_space<vmem>>, vector<1x8x128xf32>
      tpu.vector_store %arg5[%c0_28, %c0_29, %c0_30], %40 {strides = array<i32>} : memref<1x8x128xf32, #tpu.memory_space<vmem>>, vector<1x8x128xf32>,
    } else {
    }
    return
  }
  func.func @transform_0(%arg0: i32) -> (i32, i32) {
    %c0_i32 = arith.constant 0 : i32
    %c0_i32_0 = arith.constant 0 : i32
    return %arg0, %c0_i32 : i32, i32
  }
  func.func @transform_1(%arg0: i32) -> (i32, i32) {
    %c0_i32 = arith.constant 0 : i32
    %c0_i32_0 = arith.constant 0 : i32
    return %arg0, %c0_i32 : i32, i32
  }
  func.func @transform_2(%arg0: i32) -> (i32, i32) {
    %c0_i32 = arith.constant 0 : i32
    %c0_i32_0 = arith.constant 0 : i32
    %c0_i32_1 = arith.constant 0 : i32
    return %c0_i32, %c0_i32_0 : i32, i32
  }
  func.func @transform_3(%arg0: i32) -> (i32, i32) {
    %c0_i32 = arith.constant 0 : i32
    %c0_i32_0 = arith.constant 0 : i32
    %c0_i32_1 = arith.constant 0 : i32
    return %c0_i32, %c0_i32_0 : i32, i32
  }
  func.func @transform_4(%arg0: i32) -> (i32, i32, i32) {
    %c0_i32 = arith.constant 0 : i32
    %c0_i32_0 = arith.constant 0 : i32
    %c0_i32_1 = arith.constant 0 : i32
    %c0_i32_2 = arith.constant 0 : i32
    return %c0_i32, %c0_i32_0, %c0_i32_1 : i32, i32, i32
  }
}

</mosaic_0001>

<llo_original>
// kernel: tpu_custom_call.1
$region0: #{tpu_custom_call.1}
  #allocation0 [shape = 'u32[]', space=smem, size = 0x4, offset = 0x4, fixed_abs, tag = 'smem constant byte address 0x4 - core index']
  #allocation1 [shape = 'u32[144,128]{1,0:T(1,128)}', space=vmem, size = 0x12000, scoped, tag = 'internal scratch']
  #allocation2 [shape = 'f32[8,128]{1,0:T(8,128)}', space=vmem, size = 0x1000, scoped, tag = 'scratch operand']
  %s0 = inlined_call_operand.hbm [shape: f32[16,128], index: 0, kind: input, shape index: {}]
  %s1 = inlined_call_operand.hbm [shape: f32[16,128], index: 1, kind: input, shape index: {}]
  %s2 = inlined_call_operand.vmem [shape: f32[2,32], index: 2, kind: input, shape index: {}]
  %s3 = inlined_call_operand.vmem [shape: f32[2,32], index: 3, kind: input, shape index: {}]
  %s4 = inlined_call_operand.hbm [shape: f32[1,8,128], index: 4, kind: output, shape index: {}]
  %s5 = sld [smem:[#allocation0]]
  $region42: #{tpu_custom_call.1} parent=0
    _
  %s7 = ssub.s32 1, %s5
  %s8 = scalar_select 0, %s7, %s5
  $region1: #{tpu_custom_call.1} parent=0
    #allocation3 [shape = 'u8[8192]{0}', space=vmem, size = 0x2000, scoped, tag = 'input window, operand 0, single buffered']
    #allocation4 [shape = 's32[1]{0}', space=sflag, size = 0x4, scoped, tag = 'scoped memory for tpu_custom_call.1']
    #allocation5 [shape = 's32[1]{0}', space=sflag, size = 0x4, scoped, tag = 'scoped memory for tpu_custom_call.1']
    #allocation6 [shape = 'u8[8192]{0}', space=vmem, size = 0x2000, scoped, tag = 'input window, operand 1, single buffered']
    #allocation7 [shape = 's32[1]{0}', space=sflag, size = 0x4, scoped, tag = 'scoped memory for tpu_custom_call.1']
    #allocation8 [shape = 'u8[4096]{0}', space=vmem, size = 0x1000, scoped, tag = 'output window, operand 0, single buffered']
    %9 = vsyncpa [#allocation4], 0
    %10 = vsyncpa [#allocation7], 0
    %11 = vsyncpa [#allocation5], 0
    // Predicated region
    $region2: #{tpu_custom_call.1} parent=1 // pred_check
      _
    $region3: #{tpu_custom_call.1} parent=1 // pred_check_branch
      %13 = sbr.rel (0) target = $region5
    $region4: #{tpu_custom_call.1} parent=1 // pred_region
      %s15 = ssub.s32 256, 256
      %16 = vsyncadd [#allocation4], %s15
      %s17 = sshll.u32 [#allocation3], 4
      %s18 = int_to_ptr.vmem [resolvable:$true] %s17
      %23 = dma.hbm_to_vmem [thread:$0]  %s0, 256, %s18, [#allocation4], 128, 128, 8
    $region5: #{tpu_custom_call.1} parent=1 // pred_fallthru
      _
    // Predicated region
    $region6: #{tpu_custom_call.1} parent=1 // pred_check
      _
    $region7: #{tpu_custom_call.1} parent=1 // pred_check_branch
      %25 = sbr.rel (0) target = $region9
    $region8: #{tpu_custom_call.1} parent=1 // pred_region
      %s27 = ssub.s32 256, 256
      %28 = vsyncadd [#allocation7], %s27
      %s29 = sshll.u32 [#allocation6], 4
      %s30 = int_to_ptr.vmem [resolvable:$true] %s29
      %35 = dma.hbm_to_vmem [thread:$0]  %s1, 256, %s30, [#allocation7], 128, 128, 8
    $region9: #{tpu_custom_call.1} parent=1 // pred_fallthru
      _
    // Predicated region
    $region10: #{tpu_custom_call.1} parent=1 // pred_check
      _
    $region11: #{tpu_custom_call.1} parent=1 // pred_check_branch
      %37 = sbr.rel (0) target = $region13
    $region12: #{tpu_custom_call.1} parent=1 // pred_region
      _
    $region13: #{tpu_custom_call.1} parent=1 // pred_fallthru
      _
    // Predicated region
    $region14: #{tpu_custom_call.1} parent=1 // pred_check
      _
    $region15: #{tpu_custom_call.1} parent=1 // pred_check_branch
      %39 = sbr.rel (0) target = $region17
    $region16: #{tpu_custom_call.1} parent=1 // pred_region
      _
    $region17: #{tpu_custom_call.1} parent=1 // pred_fallthru
      _
    // Predicated region
    $region18: #{tpu_custom_call.1} parent=1 // pred_check
      _
    $region19: #{tpu_custom_call.1} parent=1 // pred_check_branch
      %41 = sbr.rel (0) target = $region21
    $region20: #{tpu_custom_call.1} parent=1 // pred_region
      %42 = dma.done [#allocation4], 256
    $region21: #{tpu_custom_call.1} parent=1 // pred_fallthru
      _
    // Predicated region
    $region22: #{tpu_custom_call.1} parent=1 // pred_check
      _
    $region23: #{tpu_custom_call.1} parent=1 // pred_check_branch
      %44 = sbr.rel (0) target = $region25
    $region24: #{tpu_custom_call.1} parent=1 // pred_region
      %45 = dma.done [#allocation7], 256
    $region25: #{tpu_custom_call.1} parent=1 // pred_fallthru
      _
    %p46 = scmp.eq.s32.totalorder 0, 0
    // Predicated region
    $region26: #{tpu_custom_call.1} parent=1 // pred_check
      %p47 = pneg %p46
    $region27: #{tpu_custom_call.1} parent=1 // pred_check_branch
      %49 = sbr.rel (%p47) target = $region29
    $region28: #{tpu_custom_call.1} parent=1 // pred_region
      %50 = vst [vmem:[#allocation2] sm:$0xff] 0.0
    $region29: #{tpu_custom_call.1} parent=1 // pred_fallthru
      _
    %v51 = vld [vmem:[#allocation2] sm:$0xff]
    %v52 = vld [vmem:[#allocation3] sm:$0xff]
    %v53 = vld [vmem:[#allocation3 + $0x8] sm:$0xff]
    %v54 = vld [vmem:[#allocation6] sm:$0xff]
    %v55 = vld [vmem:[#allocation6 + $0x8] sm:$0xff]
    %v56 = vsub.f32 %v52, %v54
    %v57 = vsub.f32 %v53, %v55
    %v58 = vmul.f32 %v56, %v56
    %v59 = vmul.f32 %v57, %v57
    %v60 = vadd.f32 %v58, %v59
    %v61 = vadd.f32 %v51, %v60
    %62 = vst [vmem:[#allocation2] sm:$0xff] %v61
    // Predicated region
    $region30: #{tpu_custom_call.1} parent=1 // pred_check
      %p63 = pneg %p46
    $region31: #{tpu_custom_call.1} parent=1 // pred_check_branch
      %65 = sbr.rel (%p63) target = $region33
    $region32: #{tpu_custom_call.1} parent=1 // pred_region
      %v66 = vld [vmem:[#allocation2] sm:$0xff]
      %67 = vadd.xlane.f32.xlu0 %v66
      %v68 = vpop.xlane.xlu0 %67
      %v69 = vrot.slane %v68, 4
      %v70 = vadd.f32 %v68, %v69
      %v71 = vrot.slane %v70, 2
      %v72 = vadd.f32 %v70, %v71
      %v73 = vrot.slane %v72, 1
      %v74 = vadd.f32 %v72, %v73
      %s75 = vtos %v74
      %s76 = smul.f32 %s75, 0.00048828125
      %v77 = vstv %s76
      %78 = vst [vmem:[#allocation8] sm:$0xff] %v77
      %v79 = vld [vmem:[%s3] sm:$0x3]
      %v80 = vld [vmem:[%s2] sm:$0x3]
      %v81 = vmul.f32 %v79, 1.442695
      %v82 = vpow.pop %v81
      %v83 = vsub.f32 %v79, %v82
      %v84 = vmul.f32 %v80, %v80
      %v85 = vsub.f32 %v83, %v84
      %v86 = vadd.f32 %v85, 1.0
      %v87 = vmul.f32 %v86, -0.5
      %vm88 = vcmask 254976
      %v89 = vsel %vm88, %v87, 0.0
      %90 = vadd.xlane.f32.xlu0 %v89
      %v91 = vpop.xlane.xlu0 %90
      %v92 = vrot.slane %v91, 4
      %v93 = vadd.f32 %v91, %v92
      %v94 = vrot.slane %v93, 2
      %v95 = vadd.f32 %v93, %v94
      %v96 = vrot.slane %v95, 1
      %v97 = vadd.f32 %v95, %v96
      %s98 = vtos %v97
      %s99 = smul.f32 %s98, 0.015625
      %v100 = vld [vmem:[#allocation8] sm:$0xff]
      %v101 = vstv %s99
      %v102 = vadd.f32 %v100, %v101
      %103 = vst [vmem:[#allocation8] sm:$0xff] %v102
    $region33: #{tpu_custom_call.1} parent=1 // pred_fallthru
      _
    // Predicated region
    $region34: #{tpu_custom_call.1} parent=1 // pred_check
      _
    $region35: #{tpu_custom_call.1} parent=1 // pred_check_branch
      %105 = sbr.rel (0) target = $region37
    $region36: #{tpu_custom_call.1} parent=1 // pred_region
      %s107 = ssub.s32 128, 128
      %108 = vsyncadd [#allocation5], %s107
      %s110 = sshll.u32 [#allocation8], 4
      %s111 = int_to_ptr.vmem [resolvable:$true] %s110
      %113 = dma.vmem_to_hbm [thread:$0]  %s111, 128, %s4, [#allocation5]
    $region37: #{tpu_custom_call.1} parent=1 // pred_fallthru
      _
    // Predicated region
    $region38: #{tpu_custom_call.1} parent=1 // pred_check
      _
    $region39: #{tpu_custom_call.1} parent=1 // pred_check_branch
      %115 = sbr.rel (0) target = $region41
    $region40: #{tpu_custom_call.1} parent=1 // pred_region
      %116 = dma.done [#allocation5], 128
    $region41: #{tpu_custom_call.1} parent=1 // pred_fallthru
      _
    %117 = vsyncpa [#allocation4], 1
    %118 = vsyncpa [#allocation7], 1
    %119 = vsyncpa [#allocation5], 1

</llo_original>
